<compile_context>
chip_gen: v5e
topology: v5e:2x2
jax: 0.10.0
libtpu: 0.0.40
codegen_flags: <defaults>
</compile_context>

<pallas_src>
import jax
import jax.numpy as jnp
from jax.experimental import pallas as pl
from jax.experimental.pallas import tpu as pltpu


def _mlp_kernel(x_ref,
                w1_ref, b1_ref,
                w2_ref, b2_ref,
                w3_ref, b3_ref,
                w4t_ref, b4_ref,
                o_ref):
    x = x_ref[...]                                                   # (TB, F) bf16

    # Layer 1: Linear(F,128) -> ReLU        (BN1 folded into layer-2 weights)
    h = jnp.dot(x, w1_ref[...], preferred_element_type=jnp.float32) + b1_ref[...]
    h = jnp.maximum(h, 0.0)

    # Layer 2: Linear(128,64) -> ReLU       (BN2 folded into layer-3 weights)
    h = jnp.dot(h.astype(w2_ref.dtype), w2_ref[...],
                preferred_element_type=jnp.float32) + b2_ref[...]
    h = jnp.maximum(h, 0.0)

    # Layer 3: Linear(64,32) -> ReLU        (BN3 folded into the head weights)
    h = jnp.dot(h.astype(w3_ref.dtype), w3_ref[...],
                preferred_element_type=jnp.float32) + b3_ref[...]
    h = jnp.maximum(h, 0.0)

    # Output head (out_features=1): VPU multiply + cross-lane reduce, then sigmoid.
    logits = jnp.sum(h * w4t_ref[...].astype(jnp.float32), axis=-1, keepdims=True)
    logits = logits + b4_ref[...]
    o_ref[...] = jax.nn.sigmoid(logits)                              # (TB, 1) f32


def patent_revocation_forward(x, params, *, tb=512, compute_dtype=jnp.bfloat16):
    """Runs the fused, batch-tiled MLP kernel.  x: (B, input_size) float32.

    tb: rows per grid step (multiple of 8; 512-2048 is a good range on
        v5e/v6e, keep <=1024 on v7x's 64 MiB VMEM).
    """
    B, F = x.shape

    # ---- Fold eval-mode BatchNorm (scale/shift) into the next Linear. ----
    s1, t1 = params["s1"], params["t1"]
    s2, t2 = params["s2"], params["t2"]
    s3, t3 = params["s3"], params["t3"]
    w1, b1 = params["w1"], params["b1"]
    w2 = params["w2"] * s1.T
    b2 = params["b2"] + t1 @ params["w2"]
    w3 = params["w3"] * s2.T
    b3 = params["b3"] + t2 @ params["w3"]
    w4 = params["w4"] * s3.T
    b4 = params["b4"] + t3 @ params["w4"]
    w4t = w4.T                                                       # (1, 32)

    # bf16 matmul operands, f32 biases / accumulation.
    xc = x.astype(compute_dtype)
    w1, w2, w3, w4t = (w.astype(compute_dtype) for w in (w1, w2, w3, w4t))
    b1, b2, b3, b4 = (b.astype(jnp.float32) for b in (b1, b2, b3, b4))

    # Pad the batch to a multiple of the tile so every grid block is full.
    num_tiles = pl.cdiv(B, tb)
    Bp = num_tiles * tb
    if Bp != B:
        xc = jnp.pad(xc, ((0, Bp - B), (0, 0)))

    flat = [w1, b1, w2, b2, w3, b3, w4t, b4]

    def resident(arr):
        # Full-array block, same block every grid step -> stays VMEM-resident.
        return pl.BlockSpec(arr.shape, lambda i: (0, 0))

    flops = 2 * Bp * (F * 128 + 128 * 64 + 64 * 32 + 32)
    bytes_accessed = (Bp * F * 2 + Bp * 4
                      + (F * 128 + 128 * 64 + 64 * 32 + 32) * 2
                      + (128 + 64 + 32 + 1) * 4)

    out = pl.pallas_call(
        _mlp_kernel,
        out_shape=jax.ShapeDtypeStruct((Bp, 1), jnp.float32),
        grid=(num_tiles,),
        in_specs=[pl.BlockSpec((tb, F), lambda i: (i, 0))]   # x: batch-tiled, pipelined
                 + [resident(w) for w in flat],              # weights: resident
        out_specs=pl.BlockSpec((tb, 1), lambda i: (i, 0)),
        compiler_params=pltpu.CompilerParams(
            dimension_semantics=("parallel",)),              # megacore on v7x
        cost_estimate=pl.CostEstimate(flops=flops,
                                      transcendentals=Bp,
                                      bytes_accessed=bytes_accessed),
    )(xc, *flat)
    return out[:B]


def init_params(key, input_size):
    """Deterministic synthetic parameters matching the PyTorch module shapes."""
    dims = [(input_size, 128), (128, 64), (64, 32), (32, 1)]
    keys = jax.random.split(key, 16)
    params = {}
    eps = 1e-5
    for i, (fan_in, fan_out) in enumerate(dims, start=1):
        kw, kb, kg, kbeta = keys[4 * (i - 1): 4 * i]
        bound = 1.0 / jnp.sqrt(float(fan_in))
        # Linear weight stored (in, out) so forward is x @ W + b.
        params[f"w{i}"] = jax.random.uniform(kw, (fan_in, fan_out), jnp.float32,
                                             -bound, bound)
        params[f"b{i}"] = jax.random.uniform(kb, (1, fan_out), jnp.float32,
                                             -bound, bound)
        if i <= 3:
            # BatchNorm1d(fan_out): synthetic gamma/beta/running stats,
            # pre-folded into eval-mode scale/shift.
            gamma = 1.0 + 0.1 * jax.random.normal(kg, (1, fan_out), jnp.float32)
            beta = 0.1 * jax.random.normal(kbeta, (1, fan_out), jnp.float32)
            running_mean = jnp.zeros((1, fan_out), jnp.float32)
            running_var = jnp.ones((1, fan_out), jnp.float32)
            scale = gamma / jnp.sqrt(running_var + eps)
            shift = beta - running_mean * scale
            params[f"s{i}"] = scale
            params[f"t{i}"] = shift
    return params


def reference_forward(x, params):
    """Plain-JAX f32 reference of the original (unfolded) eval-mode forward."""
    h = x
    for i in range(1, 4):
        h = h @ params[f"w{i}"] + params[f"b{i}"]
        h = jnp.maximum(h, 0.0)
        h = h * params[f"s{i}"] + params[f"t{i}"]
    logits = h @ params["w4"] + params["b4"]
    return jax.nn.sigmoid(logits)


if __name__ == "__main__":
    key = jax.random.PRNGKey(0)
    k_params, k_x = jax.random.split(key)

    batch = 200              # deliberately not a multiple of the tile
    input_size = 32          # X_train.shape[1] (synthetic)

    params = init_params(k_params, input_size)
    x = jax.random.normal(k_x, (batch, input_size), jnp.float32)

    out = patent_revocation_forward(x, params, tb=128)
    out = jax.block_until_ready(out)

    ref = reference_forward(x, params)
    assert out.shape == (batch, 1)
    assert bool(jnp.all(jnp.isfinite(out)))
    max_err = float(jnp.max(jnp.abs(out - ref)))
    # bf16 matmul operands with f32 accumulation -> loosened tolerance.
    assert max_err < 2e-2, f"mismatch vs reference: max abs err {max_err}"

    print("KERNEL_OK")
</pallas_src>

<mosaic_0001>
module attributes {stable_mosaic.version = 11 : i64} {
  func.func @_mlp_kernel(%arg0: i32, %arg1: memref<128x32xbf16, #tpu.memory_space<vmem>>, %arg2: memref<32x128xbf16, #tpu.memory_space<vmem>>, %arg3: memref<1x128xf32, #tpu.memory_space<vmem>>, %arg4: memref<128x64xbf16, #tpu.memory_space<vmem>>, %arg5: memref<1x64xf32, #tpu.memory_space<vmem>>, %arg6: memref<64x32xbf16, #tpu.memory_space<vmem>>, %arg7: memref<1x32xf32, #tpu.memory_space<vmem>>, %arg8: memref<1x32xbf16, #tpu.memory_space<vmem>>, %arg9: memref<1x1xf32, #tpu.memory_space<vmem>>, %arg10: memref<128x1xf32, #tpu.memory_space<vmem>>) attributes {dimension_semantics = [#tpu.dimension_semantics<parallel>], iteration_bounds = array<i64: 2>, scalar_prefetch = 0 : i64, scratch_operands = 0 : i64, tpu.core_type = #tpu.core_type<tc>, window_params = [{transform_indices = @transform_0, window_bounds = array<i64: 128, 32>}, {pipeline_mode = #tpu.pipeline_mode<synchronous>, transform_indices = @transform_1, window_bounds = array<i64: 32, 128>}, {pipeline_mode = #tpu.pipeline_mode<synchronous>, transform_indices = @transform_2, window_bounds = array<i64: 1, 128>}, {pipeline_mode = #tpu.pipeline_mode<synchronous>, transform_indices = @transform_3, window_bounds = array<i64: 128, 64>}, {pipeline_mode = #tpu.pipeline_mode<synchronous>, transform_indices = @transform_4, window_bounds = array<i64: 1, 64>}, {pipeline_mode = #tpu.pipeline_mode<synchronous>, transform_indices = @transform_5, window_bounds = array<i64: 64, 32>}, {pipeline_mode = #tpu.pipeline_mode<synchronous>, transform_indices = @transform_6, window_bounds = array<i64: 1, 32>}, {pipeline_mode = #tpu.pipeline_mode<synchronous>, transform_indices = @transform_7, window_bounds = array<i64: 1, 32>}, {pipeline_mode = #tpu.pipeline_mode<synchronous>, transform_indices = @transform_8, window_bounds = array<i64: 1, 1>}, {transform_indices = @transform_9, window_bounds = array<i64: 128, 1>}]} {
    %c0 = arith.constant 0 : index
    %c0_0 = arith.constant 0 : index
    %0 = vector.load %arg1[%c0, %c0_0] : memref<128x32xbf16, #tpu.memory_space<vmem>>, vector<128x32xbf16>
    %c0_1 = arith.constant 0 : index
    %c0_2 = arith.constant 0 : index
    %1 = vector.load %arg2[%c0_1, %c0_2] : memref<32x128xbf16, #tpu.memory_space<vmem>>, vector<32x128xbf16>
    %cst = arith.constant dense<0.000000e+00> : vector<128x128xf32>
    %2 = tpu.matmul %0, %1, %cst {dimension_numbers = #tpu.dot_dimension_numbers<[1], [0], [0], [1], [0, 0, 1, 1], [], []>} : vector<128x32xbf16>, vector<32x128xbf16>, vector<128x128xf32> -> vector<128x128xf32>
    %c0_3 = arith.constant 0 : index
    %c0_4 = arith.constant 0 : index
    %3 = vector.load %arg3[%c0_3, %c0_4] : memref<1x128xf32, #tpu.memory_space<vmem>>, vector<1x128xf32>
    %4 = vector.broadcast %3 : vector<1x128xf32> to vector<128x128xf32>
    %5 = arith.addf %2, %4 : vector<128x128xf32>
    %cst_5 = arith.constant 0.000000e+00 : f32
    %6 = vector.broadcast %cst_5 : f32 to vector<128x128xf32>
    %7 = arith.maximumf %5, %6 : vector<128x128xf32>
    %8 = arith.truncf %7 : vector<128x128xf32> to vector<128x128xbf16>
    %c0_6 = arith.constant 0 : index
    %c0_7 = arith.constant 0 : index
    %9 = vector.load %arg4[%c0_6, %c0_7] : memref<128x64xbf16, #tpu.memory_space<vmem>>, vector<128x64xbf16>
    %cst_8 = arith.constant dense<0.000000e+00> : vector<128x64xf32>
    %10 = tpu.matmul %8, %9, %cst_8 {dimension_numbers = #tpu.dot_dimension_numbers<[1], [0], [0], [1], [0, 0, 1, 1], [], []>} : vector<128x128xbf16>, vector<128x64xbf16>, vector<128x64xf32> -> vector<128x64xf32>
    %c0_9 = arith.constant 0 : index
    %c0_10 = arith.constant 0 : index
    %11 = vector.load %arg5[%c0_9, %c0_10] : memref<1x64xf32, #tpu.memory_space<vmem>>, vector<1x64xf32>
    %12 = vector.broadcast %11 : vector<1x64xf32> to vector<128x64xf32>
    %13 = arith.addf %10, %12 : vector<128x64xf32>
    %cst_11 = arith.constant 0.000000e+00 : f32
    %14 = vector.broadcast %cst_11 : f32 to vector<128x64xf32>
    %15 = arith.maximumf %13, %14 : vector<128x64xf32>
    %16 = arith.truncf %15 : vector<128x64xf32> to vector<128x64xbf16>
    %c0_12 = arith.constant 0 : index
    %c0_13 = arith.constant 0 : index
    %17 = vector.load %arg6[%c0_12, %c0_13] : memref<64x32xbf16, #tpu.memory_space<vmem>>, vector<64x32xbf16>
    %cst_14 = arith.constant dense<0.000000e+00> : vector<128x32xf32>
    %18 = tpu.matmul %16, %17, %cst_14 {dimension_numbers = #tpu.dot_dimension_numbers<[1], [0], [0], [1], [0, 0, 1, 1], [], []>} : vector<128x64xbf16>, vector<64x32xbf16>, vector<128x32xf32> -> vector<128x32xf32>
    %c0_15 = arith.constant 0 : index
    %c0_16 = arith.constant 0 : index
    %19 = vector.load %arg7[%c0_15, %c0_16] : memref<1x32xf32, #tpu.memory_space<vmem>>, vector<1x32xf32>
    %20 = vector.broadcast %19 : vector<1x32xf32> to vector<128x32xf32>
    %21 = arith.addf %18, %20 : vector<128x32xf32>
    %cst_17 = arith.constant 0.000000e+00 : f32
    %22 = vector.broadcast %cst_17 : f32 to vector<128x32xf32>
    %23 = arith.maximumf %21, %22 : vector<128x32xf32>
    %c0_18 = arith.constant 0 : index
    %c0_19 = arith.constant 0 : index
    %24 = vector.load %arg8[%c0_18, %c0_19] : memref<1x32xbf16, #tpu.memory_space<vmem>>, vector<1x32xbf16>
    %25 = arith.extf %24 : vector<1x32xbf16> to vector<1x32xf32>
    %26 = vector.broadcast %25 : vector<1x32xf32> to vector<128x32xf32>
    %27 = arith.mulf %23, %26 : vector<128x32xf32>
    %cst_20 = arith.constant dense<0.000000e+00> : vector<128xf32>
    %28 = vector.multi_reduction <add>, %27, %cst_20 [1] : vector<128x32xf32> to vector<128xf32>
    %29 = vector.shape_cast %28 : vector<128xf32> to vector<128x1xf32>
    %c0_21 = arith.constant 0 : index
    %c0_22 = arith.constant 0 : index
    %30 = vector.load %arg9[%c0_21, %c0_22] : memref<1x1xf32, #tpu.memory_space<vmem>>, vector<1x1xf32>
    %31 = vector.broadcast %30 : vector<1x1xf32> to vector<128x1xf32>
    %32 = arith.addf %29, %31 : vector<128x1xf32>
    %33 = arith.negf %32 : vector<128x1xf32>
    %34 = math.exp %33 : vector<128x1xf32>
    %cst_23 = arith.constant 1.000000e+00 : f32
    %35 = vector.broadcast %cst_23 : f32 to vector<128x1xf32>
    %36 = arith.addf %35, %34 : vector<128x1xf32>
    %37 = arith.divf %35, %36 : vector<128x1xf32>
    %c0_24 = arith.constant 0 : index
    %c0_25 = arith.constant 0 : index
    %38 = vector.load %arg10[%c0_24, %c0_25] : memref<128x1xf32, #tpu.memory_space<vmem>>, vector<128x1xf32>
    tpu.vector_store %arg10[%c0_24, %c0_25], %37 {strides = array<i32>} : memref<128x1xf32, #tpu.memory_space<vmem>>, vector<128x1xf32>,
    return
  }
  func.func @transform_0(%arg0: i32) -> (i32, i32) {
    %c0_i32 = arith.constant 0 : i32
    %c0_i32_0 = arith.constant 0 : i32
    return %arg0, %c0_i32 : i32, i32
  }
  func.func @transform_1(%arg0: i32) -> (i32, i32) {
    %c0_i32 = arith.constant 0 : i32
    %c0_i32_0 = arith.constant 0 : i32
    %c0_i32_1 = arith.constant 0 : i32
    return %c0_i32, %c0_i32_0 : i32, i32
  }
  func.func @transform_2(%arg0: i32) -> (i32, i32) {
    %c0_i32 = arith.constant 0 : i32
    %c0_i32_0 = arith.constant 0 : i32
    %c0_i32_1 = arith.constant 0 : i32
    return %c0_i32, %c0_i32_0 : i32, i32
  }
  func.func @transform_3(%arg0: i32) -> (i32, i32) {
    %c0_i32 = arith.constant 0 : i32
    %c0_i32_0 = arith.constant 0 : i32
    %c0_i32_1 = arith.constant 0 : i32
    return %c0_i32, %c0_i32_0 : i32, i32
  }
  func.func @transform_4(%arg0: i32) -> (i32, i32) {
    %c0_i32 = arith.constant 0 : i32
    %c0_i32_0 = arith.constant 0 : i32
    %c0_i32_1 = arith.constant 0 : i32
    return %c0_i32, %c0_i32_0 : i32, i32
  }
  func.func @transform_5(%arg0: i32) -> (i32, i32) {
    %c0_i32 = arith.constant 0 : i32
    %c0_i32_0 = arith.constant 0 : i32
    %c0_i32_1 = arith.constant 0 : i32
    return %c0_i32, %c0_i32_0 : i32, i32
  }
  func.func @transform_6(%arg0: i32) -> (i32, i32) {
    %c0_i32 = arith.constant 0 : i32
    %c0_i32_0 = arith.constant 0 : i32
    %c0_i32_1 = arith.constant 0 : i32
    return %c0_i32, %c0_i32_0 : i32, i32
  }
  func.func @transform_7(%arg0: i32) -> (i32, i32) {
    %c0_i32 = arith.constant 0 : i32
    %c0_i32_0 = arith.constant 0 : i32
    %c0_i32_1 = arith.constant 0 : i32
    return %c0_i32, %c0_i32_0 : i32, i32
  }
  func.func @transform_8(%arg0: i32) -> (i32, i32) {
    %c0_i32 = arith.constant 0 : i32
    %c0_i32_0 = arith.constant 0 : i32
    %c0_i32_1 = arith.constant 0 : i32
    return %c0_i32, %c0_i32_0 : i32, i32
  }
  func.func @transform_9(%arg0: i32) -> (i32, i32) {
    %c0_i32 = arith.constant 0 : i32
    %c0_i32_0 = arith.constant 0 : i32
    return %arg0, %c0_i32 : i32, i32
  }
}

</mosaic_0001>

<llo_original>
// kernel: tpu_custom_call.1
$region0: #{tpu_custom_call.1}
  #allocation0 [shape = 'u32[]', space=smem, size = 0x4, offset = 0x4, fixed_abs, tag = 'smem constant byte address 0x4 - core index']
  #allocation1 [shape = 'u32[72,128]{1,0:T(1,128)}', space=vmem, size = 0x9000, scoped, tag = 'internal scratch']
  #allocation2 [shape = 'f32[1,1]{1,0:T(1,128)S(1)}', space=vmem, size = 0x200, scoped, tag = 'scoped memory for tpu_custom_call.1']
  %s0 = inlined_call_operand.vmem [shape: bf16[256,32], index: 0, kind: input, shape index: {}]
  %s1 = inlined_call_operand.vmem [shape: bf16[32,128], index: 1, kind: input, shape index: {}]
  %s2 = inlined_call_operand.vmem [shape: f32[1,128], index: 2, kind: input, shape index: {}]
  %s3 = inlined_call_operand.vmem [shape: bf16[128,64], index: 3, kind: input, shape index: {}]
  %s4 = inlined_call_operand.vmem [shape: f32[1,64], index: 4, kind: input, shape index: {}]
  %s5 = inlined_call_operand.vmem [shape: bf16[64,32], index: 5, kind: input, shape index: {}]
  %s6 = inlined_call_operand.vmem [shape: f32[1,32], index: 6, kind: input, shape index: {}]
  %s7 = inlined_call_operand.vmem [shape: bf16[1,32], index: 7, kind: input, shape index: {}]
  %s8 = inlined_call_operand.<no memory space> [shape: f32[1,1], index: 8, kind: input, shape index: {}]
  %s9 = inlined_call_operand.vmem [shape: f32[256,1], index: 9, kind: output, shape index: {}]
  %s10 = sld [smem:[#allocation0]]
  $region69: #{tpu_custom_call.1} parent=0
    _
  %s12 = ssub.s32 1, %s10
  %s13 = scalar_select 0, %s12, %s10
  %v14 = vstv %s8
  %15 = vst [vmem:[#allocation2] sm:$0x1] %v14
  loop: start=0, step=1, limit=4
  $region2: #{tpu_custom_call.1} parent=0 // loop_pre_header
    _
  $region3: #{tpu_custom_call.1} parent=0 // loop_header
    %s17 = sphi 0, %s21
    %p18 = scmp.ge.s32.totalorder %s17, 4
    %s27 = sphi 0, %s29
    %s30 = sphi 0, %s27
    %s31 = sphi 0, %s30
    %s47 = sphi 0, %s31
    %s51 = sphi 0, %s51
    %s53 = sphi 0, %s51
    %s54 = sphi 0, %s53
    %s68 = sphi 0, %s54
    %s72 = sphi 0, %s72
    %s74 = sphi 0, %s72
    %s75 = sphi 0, %s74
    %s89 = sphi 0, %s75
    %s93 = sphi 0, %s93
    %s95 = sphi 0, %s93
    %s96 = sphi 0, %s95
    %s110 = sphi 0, %s96
    %s114 = sphi 0, %s114
    %s116 = sphi 0, %s114
    %s117 = sphi 0, %s116
    %s131 = sphi 0, %s117
    %s135 = sphi 0, %s135
    %s137 = sphi 0, %s135
    %s138 = sphi 0, %s137
    %s152 = sphi 0, %s138
    %s156 = sphi 0, %s156
    %s158 = sphi 0, %s156
    %s159 = sphi 0, %s158
    %s173 = sphi 0, %s159
    %s177 = sphi 0, %s177
    %s179 = sphi 0, %s177
    %s180 = sphi 0, %s179
    %s194 = sphi 0, %s180
    %s198 = sphi 0, %s198
    %s200 = sphi 0, %s198
    %s201 = sphi 0, %s200
    %s215 = sphi 0, %s201
    %s221 = sphi 0, %s223
    %s224 = sphi 0, %s221
    %s225 = sphi 0, %s224
    %s241 = sphi 0, %s225
  $region4: #{tpu_custom_call.1} parent=0 // loop_header_branch
    %20 = sbr.rel (%p18) target = $region8
  $region5: #{tpu_custom_call.1} parent=0 // loop_body
    %s22 = ssub.s32 %s17, 1
    %s23 = ssub.s32 %s17, 2
    %s24 = sadd.s32 %s17, 1
    %s25 = ssub.s32 %s17, %s24
    %p26 = scmp.eq.s32.totalorder %s25, 0
    %s28 = sadd.s32 %s27, 1
    %s29 = scalar_select %p26, %s27, %s28
    %p32 = pneg %p26
    %p33 = scmp.eq.s32.totalorder %s17, 1
    %p34 = por %p32, %p33
    %p35 = scmp.ne.s32.totalorder %s27, %s30
    %p36 = scmp.eq.s32.totalorder %s17, 0
    %p37 = por %p35, %p36
    %p38 = scmp.ne.s32.totalorder %s27, %s30
    %p39 = scmp.eq.s32.totalorder %s22, 1
    %p40 = por %p38, %p39
    %p41 = scmp.ne.s32.totalorder %s30, %s31
    %p42 = scmp.eq.s32.totalorder %s22, 0
    %p43 = por %p41, %p42
    %p44 = scmp.ne.s32.totalorder %s30, %s31
    %p45 = scmp.eq.s32.totalorder %s23, 1
    %p46 = por %p44, %p45
    %p48 = scmp.ne.s32.totalorder %s31, %s47
    %p49 = scmp.eq.s32.totalorder %s23, 0
    %p50 = por %p48, %p49
    %s52 = sadd.s32 %s51, 1
    %p55 = scmp.eq.s32.totalorder %s17, 1
    %p56 = scmp.ne.s32.totalorder %s51, %s53
    %p57 = scmp.eq.s32.totalorder %s17, 0
    %p58 = por %p56, %p57
    %p59 = scmp.ne.s32.totalorder %s51, %s53
    %p60 = scmp.eq.s32.totalorder %s22, 1
    %p61 = por %p59, %p60
    %p62 = scmp.ne.s32.totalorder %s53, %s54
    %p63 = scmp.eq.s32.totalorder %s22, 0
    %p64 = por %p62, %p63
    %p65 = scmp.ne.s32.totalorder %s53, %s54
    %p66 = scmp.eq.s32.totalorder %s23, 1
    %p67 = por %p65, %p66
    %p69 = scmp.ne.s32.totalorder %s54, %s68
    %p70 = scmp.eq.s32.totalorder %s23, 0
    %p71 = por %p69, %p70
    %s73 = sadd.s32 %s72, 1
    %p76 = scmp.eq.s32.totalorder %s17, 1
    %p77 = scmp.ne.s32.totalorder %s72, %s74
    %p78 = scmp.eq.s32.totalorder %s17, 0
    %p79 = por %p77, %p78
    %p80 = scmp.ne.s32.totalorder %s72, %s74
    %p81 = scmp.eq.s32.totalorder %s22, 1
    %p82 = por %p80, %p81
    %p83 = scmp.ne.s32.totalorder %s74, %s75
    %p84 = scmp.eq.s32.totalorder %s22, 0
    %p85 = por %p83, %p84
    %p86 = scmp.ne.s32.totalorder %s74, %s75
    %p87 = scmp.eq.s32.totalorder %s23, 1
    %p88 = por %p86, %p87
    %p90 = scmp.ne.s32.totalorder %s75, %s89
    %p91 = scmp.eq.s32.totalorder %s23, 0
    %p92 = por %p90, %p91
    %s94 = sadd.s32 %s93, 1
    %p97 = scmp.eq.s32.totalorder %s17, 1
    %p98 = scmp.ne.s32.totalorder %s93, %s95
    %p99 = scmp.eq.s32.totalorder %s17, 0
    %p100 = por %p98, %p99
    %p101 = scmp.ne.s32.totalorder %s93, %s95
    %p102 = scmp.eq.s32.totalorder %s22, 1
    %p103 = por %p101, %p102
    %p104 = scmp.ne.s32.totalorder %s95, %s96
    %p105 = scmp.eq.s32.totalorder %s22, 0
    %p106 = por %p104, %p105
    %p107 = scmp.ne.s32.totalorder %s95, %s96
    %p108 = scmp.eq.s32.totalorder %s23, 1
    %p109 = por %p107, %p108
    %p111 = scmp.ne.s32.totalorder %s96, %s110
    %p112 = scmp.eq.s32.totalorder %s23, 0
    %p113 = por %p111, %p112
    %s115 = sadd.s32 %s114, 1
    %p118 = scmp.eq.s32.totalorder %s17, 1
    %p119 = scmp.ne.s32.totalorder %s114, %s116
    %p120 = scmp.eq.s32.totalorder %s17, 0
    %p121 = por %p119, %p120
    %p122 = scmp.ne.s32.totalorder %s114, %s116
    %p123 = scmp.eq.s32.totalorder %s22, 1
    %p124 = por %p122, %p123
    %p125 = scmp.ne.s32.totalorder %s116, %s117
    %p126 = scmp.eq.s32.totalorder %s22, 0
    %p127 = por %p125, %p126
    %p128 = scmp.ne.s32.totalorder %s116, %s117
    %p129 = scmp.eq.s32.totalorder %s23, 1
    %p130 = por %p128, %p129
    %p132 = scmp.ne.s32.totalorder %s117, %s131
    %p133 = scmp.eq.s32.totalorder %s23, 0
    %p134 = por %p132, %p133
    %s136 = sadd.s32 %s135, 1
    %p139 = scmp.eq.s32.totalorder %s17, 1
    %p140 = scmp.ne.s32.totalorder %s135, %s137
    %p141 = scmp.eq.s32.totalorder %s17, 0
    %p142 = por %p140, %p141
    %p143 = scmp.ne.s32.totalorder %s135, %s137
    %p144 = scmp.eq.s32.totalorder %s22, 1
    %p145 = por %p143, %p144
    %p146 = scmp.ne.s32.totalorder %s137, %s138
    %p147 = scmp.eq.s32.totalorder %s22, 0
    %p148 = por %p146, %p147
    %p149 = scmp.ne.s32.totalorder %s137, %s138
    %p150 = scmp.eq.s32.totalorder %s23, 1
    %p151 = por %p149, %p150
    %p153 = scmp.ne.s32.totalorder %s138, %s152
    %p154 = scmp.eq.s32.totalorder %s23, 0
    %p155 = por %p153, %p154
    %s157 = sadd.s32 %s156, 1
    %p160 = scmp.eq.s32.totalorder %s17, 1
    %p161 = scmp.ne.s32.totalorder %s156, %s158
    %p162 = scmp.eq.s32.totalorder %s17, 0
    %p163 = por %p161, %p162
    %p164 = scmp.ne.s32.totalorder %s156, %s158
    %p165 = scmp.eq.s32.totalorder %s22, 1
    %p166 = por %p164, %p165
    %p167 = scmp.ne.s32.totalorder %s158, %s159
    %p168 = scmp.eq.s32.totalorder %s22, 0
    %p169 = por %p167, %p168
    %p170 = scmp.ne.s32.totalorder %s158, %s159
    %p171 = scmp.eq.s32.totalorder %s23, 1
    %p172 = por %p170, %p171
    %p174 = scmp.ne.s32.totalorder %s159, %s173
    %p175 = scmp.eq.s32.totalorder %s23, 0
    %p176 = por %p174, %p175
    %s178 = sadd.s32 %s177, 1
    %p181 = scmp.eq.s32.totalorder %s17, 1
    %p182 = scmp.ne.s32.totalorder %s177, %s179
    %p183 = scmp.eq.s32.totalorder %s17, 0
    %p184 = por %p182, %p183
    %p185 = scmp.ne.s32.totalorder %s177, %s179
    %p186 = scmp.eq.s32.totalorder %s22, 1
    %p187 = por %p185, %p186
    %p188 = scmp.ne.s32.totalorder %s179, %s180
    %p189 = scmp.eq.s32.totalorder %s22, 0
    %p190 = por %p188, %p189
    %p191 = scmp.ne.s32.totalorder %s179, %s180
    %p192 = scmp.eq.s32.totalorder %s23, 1
    %p193 = por %p191, %p192
    %p195 = scmp.ne.s32.totalorder %s180, %s194
    %p196 = scmp.eq.s32.totalorder %s23, 0
    %p197 = por %p195, %p196
    %s199 = sadd.s32 %s198, 1
    %p202 = scmp.eq.s32.totalorder %s17, 1
    %p203 = scmp.ne.s32.totalorder %s198, %s200
    %p204 = scmp.eq.s32.totalorder %s17, 0
    %p205 = por %p203, %p204
    %p206 = scmp.ne.s32.totalorder %s198, %s200
    %p207 = scmp.eq.s32.totalorder %s22, 1
    %p208 = por %p206, %p207
    %p209 = scmp.ne.s32.totalorder %s200, %s201
    %p210 = scmp.eq.s32.totalorder %s22, 0
    %p211 = por %p209, %p210
    %p212 = scmp.ne.s32.totalorder %s200, %s201
    %p213 = scmp.eq.s32.totalorder %s23, 1
    %p214 = por %p212, %p213
    %p216 = scmp.ne.s32.totalorder %s201, %s215
    %p217 = scmp.eq.s32.totalorder %s23, 0
    %p218 = por %p216, %p217
    %s219 = ssub.s32 %s17, %s24
    %p220 = scmp.eq.s32.totalorder %s219, 0
    %s222 = sadd.s32 %s221, 1
    %s223 = scalar_select %p220, %s221, %s222
    %p226 = pneg %p220
    %p227 = scmp.eq.s32.totalorder %s17, 1
    %p228 = por %p226, %p227
    %p229 = scmp.ne.s32.totalorder %s221, %s224
    %p230 = scmp.eq.s32.totalorder %s17, 0
    %p231 = por %p229, %p230
    %p232 = scmp.ne.s32.totalorder %s221, %s224
    %p233 = scmp.eq.s32.totalorder %s22, 1
    %p234 = por %p232, %p233
    %p235 = scmp.ne.s32.totalorder %s224, %s225
    %p236 = scmp.eq.s32.totalorder %s22, 0
    %p237 = por %p235, %p236
    %p238 = scmp.ne.s32.totalorder %s224, %s225
    %p239 = scmp.eq.s32.totalorder %s23, 1
    %p240 = por %p238, %p239
    %p242 = scmp.ne.s32.totalorder %s225, %s241
    %p243 = scmp.eq.s32.totalorder %s23, 0
    %p244 = por %p242, %p243
    %p245 = scmp.le.s32.totalorder 1, %s17
    %p246 = scmp.lt.s32.totalorder %s17, 3
    %p247 = pnand %p245, %p246
    %p248 = pneg %p247
    // Predicated region
    $region9: #{tpu_custom_call.1} parent=5 // pred_check
      _
    $region10: #{tpu_custom_call.1} parent=5 // pred_check_branch
      %250 = sbr.rel (%p247) target = $region12
    $region11: #{tpu_custom_call.1} parent=5 // pred_region
      %s251 = ssub.s32 %s17, 1
      // Predicated region
      $region13: #{tpu_custom_call.1} parent=11 // pred_check
        %p252 = pneg %p64
      $region14: #{tpu_custom_call.1} parent=11 // pred_check_branch
        %254 = sbr.rel (%p252) target = $region16
      $region15: #{tpu_custom_call.1} parent=11 // pred_region
        _
      $region16: #{tpu_custom_call.1} parent=11 // pred_fallthru
        _
      // Predicated region
      $region17: #{tpu_custom_call.1} parent=11 // pred_check
        %p255 = pneg %p85
      $region18: #{tpu_custom_call.1} parent=11 // pred_check_branch
        %257 = sbr.rel (%p255) target = $region20
      $region19: #{tpu_custom_call.1} parent=11 // pred_region
        _
      $region20: #{tpu_custom_call.1} parent=11 // pred_fallthru
        _
      // Predicated region
      $region21: #{tpu_custom_call.1} parent=11 // pred_check
        %p258 = pneg %p106
      $region22: #{tpu_custom_call.1} parent=11 // pred_check_branch
        %260 = sbr.rel (%p258) target = $region24
      $region23: #{tpu_custom_call.1} parent=11 // pred_region
        _
      $region24: #{tpu_custom_call.1} parent=11 // pred_fallthru
        _
      // Predicated region
      $region25: #{tpu_custom_call.1} parent=11 // pred_check
        %p261 = pneg %p127
      $region26: #{tpu_custom_call.1} parent=11 // pred_check_branch
        %263 = sbr.rel (%p261) target = $region28
      $region27: #{tpu_custom_call.1} parent=11 // pred_region
        _
      $region28: #{tpu_custom_call.1} parent=11 // pred_fallthru
        _
      // Predicated region
      $region29: #{tpu_custom_call.1} parent=11 // pred_check
        %p264 = pneg %p148
      $region30: #{tpu_custom_call.1} parent=11 // pred_check_branch
        %266 = sbr.rel (%p264) target = $region32
      $region31: #{tpu_custom_call.1} parent=11 // pred_region
        _
      $region32: #{tpu_custom_call.1} parent=11 // pred_fallthru
        _
      // Predicated region
      $region33: #{tpu_custom_call.1} parent=11 // pred_check
        %p267 = pneg %p169
      $region34: #{tpu_custom_call.1} parent=11 // pred_check_branch
        %269 = sbr.rel (%p267) target = $region36
      $region35: #{tpu_custom_call.1} parent=11 // pred_region
        _
      $region36: #{tpu_custom_call.1} parent=11 // pred_fallthru
        _
      // Predicated region
      $region37: #{tpu_custom_call.1} parent=11 // pred_check
        %p270 = pneg %p190
      $region38: #{tpu_custom_call.1} parent=11 // pred_check_branch
        %272 = sbr.rel (%p270) target = $region40
      $region39: #{tpu_custom_call.1} parent=11 // pred_region
        _
      $region40: #{tpu_custom_call.1} parent=11 // pred_fallthru
        _
      // Predicated region
      $region41: #{tpu_custom_call.1} parent=11 // pred_check
        %p273 = pneg %p211
      $region42: #{tpu_custom_call.1} parent=11 // pred_check_branch
        %275 = sbr.rel (%p273) target = $region44
      $region43: #{tpu_custom_call.1} parent=11 // pred_region
        _
      $region44: #{tpu_custom_call.1} parent=11 // pred_fallthru
        _
    $region12: #{tpu_custom_call.1} parent=5 // pred_fallthru
      _
    %p276 = scmp.lt.s32.totalorder %s17, 2
    // Predicated region
    $region45: #{tpu_custom_call.1} parent=5 // pred_check
      %p277 = pneg %p276
    $region46: #{tpu_custom_call.1} parent=5 // pred_check_branch
      %279 = sbr.rel (%p277) target = $region48
    $region47: #{tpu_custom_call.1} parent=5 // pred_region
      // Predicated region
      $region49: #{tpu_custom_call.1} parent=47 // pred_check
        %p280 = pneg %p37
      $region50: #{tpu_custom_call.1} parent=47 // pred_check_branch
        %282 = sbr.rel (%p280) target = $region52
      $region51: #{tpu_custom_call.1} parent=47 // pred_region
        %s283 = smul.u32 16, %s17
        %p284 = scmp.lt.s32.totalorder %s283, 31
        %s285 = scalar_select %p284, %s283, 31
        %s286 = smul.addr %s285, 4
        %s287 = scalar_lea.vmem %s0, %s286
        %s288 = smul.u32 16, %s17
      $region52: #{tpu_custom_call.1} parent=47 // pred_fallthru
        _
    $region48: #{tpu_custom_call.1} parent=5 // pred_fallthru
      _
    %p289 = scmp.le.s32.totalorder 1, %s17
    %p290 = scmp.lt.s32.totalorder %s17, 3
    %p291 = pnand %p289, %p290
    %p292 = pneg %p291
    // Predicated region
    $region53: #{tpu_custom_call.1} parent=5 // pred_check
      _
    $region54: #{tpu_custom_call.1} parent=5 // pred_check_branch
      %294 = sbr.rel (%p291) target = $region56
    $region55: #{tpu_custom_call.1} parent=5 // pred_region
      %s295 = ssub.s32 %s17, 1
      %s296 = smul.u32 16, %s22
      %p297 = scmp.lt.s32.totalorder %s296, 31
      %s298 = scalar_select %p297, %s296, 31
      %s299 = smul.addr %s298, 4
      %s300 = scalar_lea.vmem %s0, %s299
      %p301 = pneg %p43
      %p302 = pneg %p40
      %p303 = pneg %p64
      %p304 = pneg %p61
      %p305 = pneg %p85
      %p306 = pneg %p82
      %p307 = pneg %p106
      %p308 = pneg %p103
      %p309 = pneg %p127
      %p310 = pneg %p124
      %p311 = pneg %p148
      %p312 = pneg %p145
      %p313 = pneg %p169
      %p314 = pneg %p166
      %p315 = pneg %p190
      %p316 = pneg %p187
      %p317 = pneg %p211
      %p318 = pneg %p208
      %p319 = pneg %p237
      %p320 = pneg %p234
      %s321 = smul.u32 16, %s22
      %p322 = scmp.lt.s32.totalorder %s321, 31
      %s323 = scalar_select %p322, %s321, 31
      %s324 = smul.addr %s323, 8
      %s325 = scalar_lea.vmem %s9, %s324
      %s326 = smul.u32 16, %s22
      %p327 = scmp.lt.s32.totalorder %s326, 31
      %s328 = scalar_select %p327, %s326, 31
      %s329 = smul.addr %s328, 4
      %s330 = scalar_lea.vmem %s0, %s329
      %s331 = smul.u32 16, %s22
      %s332 = smul.u32 16, %s22
      %p333 = scmp.lt.s32.totalorder %s332, 31
      %s334 = scalar_select %p333, %s332, 31
      %s335 = smul.addr %s334, 8
      %s336 = scalar_lea.vmem %s9, %s335
      %s337 = smul.u32 16, %s22
      %v339 = vld [vmem:[%s330] sm:$0xf]
      %v340 = vld [vmem:[%s330 + $0x4] sm:$0xf]
      %v341 = vld [vmem:[%s330 + $0x8] sm:$0xf]
      %v342 = vld [vmem:[%s330 + $0xc] sm:$0xf]
      %v343 = vld [vmem:[%s330 + $0x10] sm:$0xf]
      %v344 = vld [vmem:[%s330 + $0x14] sm:$0xf]
      %v345 = vld [vmem:[%s330 + $0x18] sm:$0xf]
      %v346 = vld [vmem:[%s330 + $0x1c] sm:$0xf]
      %v347 = vld [vmem:[%s330 + $0x20] sm:$0xf]
      %v348 = vld [vmem:[%s330 + $0x24] sm:$0xf]
      %v349 = vld [vmem:[%s330 + $0x28] sm:$0xf]
      %v350 = vld [vmem:[%s330 + $0x2c] sm:$0xf]
      %v351 = vld [vmem:[%s330 + $0x30] sm:$0xf]
      %v352 = vld [vmem:[%s330 + $0x34] sm:$0xf]
      %v353 = vld [vmem:[%s330 + $0x38] sm:$0xf]
      %v354 = vld [vmem:[%s330 + $0x3c] sm:$0xf]
      %v355 = vld [vmem:[%s1] sm:$0xf]
      %v356 = vld [vmem:[%s1 + $0x4] sm:$0xf]
      %v357 = vld [vmem:[%s1 + $0x8] sm:$0xf]
      %v358 = vld [vmem:[%s1 + $0xc] sm:$0xf]
      %v359 = vld [vmem:[%s2] sm:$0x1]
      %v361 = vperm.slane %v359, 0
      %v379 = vunpack.c.l.b16 %v339
      %v380 = vunpack.c.l.b16 %v340
      %v381 = vunpack.c.l.b16 %v341
      %v382 = vunpack.c.l.b16 %v342
      %v383 = vunpack.c.l.b16 %v343
      %v384 = vunpack.c.l.b16 %v344
      %v385 = vunpack.c.l.b16 %v345
      %v386 = vunpack.c.l.b16 %v346
      %v387 = vunpack.c.l.b16 %v347
      %v388 = vunpack.c.l.b16 %v348
      %v389 = vunpack.c.l.b16 %v349
      %v390 = vunpack.c.l.b16 %v350
      %v391 = vunpack.c.l.b16 %v351
      %v392 = vunpack.c.l.b16 %v352
      %v393 = vunpack.c.l.b16 %v353
      %v394 = vunpack.c.l.b16 %v354
      %v395 = vpack.c.b16 %v380, %v379
      %v396 = vpack.c.b16 %v382, %v381
      %v397 = vpack.c.b16 %v384, %v383
      %v398 = vpack.c.b16 %v386, %v385
      %v399 = vpack.c.b16 %v388, %v387
      %v400 = vpack.c.b16 %v390, %v389
      %v401 = vpack.c.b16 %v392, %v391
      %v402 = vpack.c.b16 %v394, %v393
      %v407 = vunpack.c.l.b16 %v355
      %v408 = vunpack.c.l.b16 %v356
      %v409 = vunpack.c.l.b16 %v357
      %v410 = vunpack.c.l.b16 %v358
      %v411 = vpack.c.b16 %v408, %v407
      %v412 = vpack.c.b16 %v410, %v409
      %vm415 = vcmask 261120
      %v417 = vsel %vm415, %v395, 0
      %v420 = vsel %vm415, %v396, 0
      %v423 = vsel %vm415, %v397, 0
      %v426 = vsel %vm415, %v398, 0
      %v429 = vsel %vm415, %v399, 0
      %v432 = vsel %vm415, %v400, 0
      %v435 = vsel %vm415, %v401, 0
      %v438 = vsel %vm415, %v402, 0
      %440 = vmatpush.bf16.msra.mxu0 0
      %441 = vmatpush.bf16.msra.mxu0 0
      %442 = vmatpush.bf16.msra.mxu0 0
      %443 = vmatpush.bf16.msra.mxu0 0
      %444 = vmatpush.bf16.msra.mxu0 0
      %445 = vmatpush.bf16.msra.mxu0 0
      %446 = vmatpush.bf16.msra.mxu0 %v412
      %447 = vmatpush.bf16.msra.mxu0 %v411
      %448 = vmatmul.bf16.gmra.mxu0 %v417
      %v449 = vpop.f32.mrf.mxu0
      %v450 = vadd.f32 %v361, %v449
      %v451 = vpop.f32.mrf.mxu0
      %v452 = vadd.f32 %v361, %v451
      %453 = vmatmul.bf16.gmra.mxu0 %v420
      %v454 = vpop.f32.mrf.mxu0
      %v455 = vadd.f32 %v361, %v454
      %v456 = vpop.f32.mrf.mxu0
      %v457 = vadd.f32 %v361, %v456
      %458 = vmatmul.bf16.gmra.mxu0 %v423
      %v459 = vpop.f32.mrf.mxu0
      %v460 = vadd.f32 %v361, %v459
      %v461 = vpop.f32.mrf.mxu0
      %v462 = vadd.f32 %v361, %v461
      %463 = vmatmul.bf16.gmra.mxu0 %v426
      %v464 = vpop.f32.mrf.mxu0
      %v465 = vadd.f32 %v361, %v464
      %v466 = vpop.f32.mrf.mxu0
      %v467 = vadd.f32 %v361, %v466
      %468 = vmatmul.bf16.gmra.mxu0 %v429
      %v469 = vpop.f32.mrf.mxu0
      %v470 = vadd.f32 %v361, %v469
      %v471 = vpop.f32.mrf.mxu0
      %v472 = vadd.f32 %v361, %v471
      %473 = vmatmul.bf16.gmra.mxu0 %v432
      %v474 = vpop.f32.mrf.mxu0
      %v475 = vadd.f32 %v361, %v474
      %v476 = vpop.f32.mrf.mxu0
      %v477 = vadd.f32 %v361, %v476
      %478 = vmatmul.bf16.gmra.mxu0 %v435
      %v479 = vpop.f32.mrf.mxu0
      %v480 = vadd.f32 %v361, %v479
      %v481 = vpop.f32.mrf.mxu0
      %v482 = vadd.f32 %v361, %v481
      %483 = vmatmul.bf16.gmra.mxu0 %v438
      %v484 = vpop.f32.mrf.mxu0
      %v485 = vadd.f32 %v361, %v484
      %v486 = vpop.f32.mrf.mxu0
      %v487 = vadd.f32 %v361, %v486
      %488 = vdwg.mxu0
      %v489 = vmax.f32 %v450, 0.0
      %v490 = vmax.f32 %v452, 0.0
      %v491 = vmax.f32 %v455, 0.0
      %v492 = vmax.f32 %v457, 0.0
      %v493 = vmax.f32 %v460, 0.0
      %v494 = vmax.f32 %v462, 0.0
      %v495 = vmax.f32 %v465, 0.0
      %v496 = vmax.f32 %v467, 0.0
      %v497 = vmax.f32 %v470, 0.0
      %v498 = vmax.f32 %v472, 0.0
      %v499 = vmax.f32 %v475, 0.0
      %v500 = vmax.f32 %v477, 0.0
      %v501 = vmax.f32 %v480, 0.0
      %v502 = vmax.f32 %v482, 0.0
      %v503 = vmax.f32 %v485, 0.0
      %v504 = vmax.f32 %v487, 0.0
      %v505 = vpack.c.bf16 %v490, %v489
      %v506 = vpack.c.bf16 %v492, %v491
      %v507 = vpack.c.bf16 %v494, %v493
      %v508 = vpack.c.bf16 %v496, %v495
      %v509 = vpack.c.bf16 %v498, %v497
      %v510 = vpack.c.bf16 %v500, %v499
      %v511 = vpack.c.bf16 %v502, %v501
      %v512 = vpack.c.bf16 %v504, %v503
      %v513 = vld [vmem:[%s3] sm:$0xf]
      %v514 = vld [vmem:[%s3 + $0x4] sm:$0xf]
      %v515 = vld [vmem:[%s3 + $0x8] sm:$0xf]
      %v516 = vld [vmem:[%s3 + $0xc] sm:$0xf]
      %v517 = vld [vmem:[%s3 + $0x10] sm:$0xf]
      %v518 = vld [vmem:[%s3 + $0x14] sm:$0xf]
      %v519 = vld [vmem:[%s3 + $0x18] sm:$0xf]
      %v520 = vld [vmem:[%s3 + $0x1c] sm:$0xf]
      %v521 = vld [vmem:[%s3 + $0x20] sm:$0xf]
      %v522 = vld [vmem:[%s3 + $0x24] sm:$0xf]
      %v523 = vld [vmem:[%s3 + $0x28] sm:$0xf]
      %v524 = vld [vmem:[%s3 + $0x2c] sm:$0xf]
      %v525 = vld [vmem:[%s3 + $0x30] sm:$0xf]
      %v526 = vld [vmem:[%s3 + $0x34] sm:$0xf]
      %v527 = vld [vmem:[%s3 + $0x38] sm:$0xf]
      %v528 = vld [vmem:[%s3 + $0x3c] sm:$0xf]
      %v529 = vld [vmem:[%s4] sm:$0x1]
      %v531 = vperm.slane %v529, 0
      %v549 = vunpack.c.l.b16 %v513
      %v550 = vunpack.c.l.b16 %v514
      %v551 = vunpack.c.l.b16 %v515
      %v552 = vunpack.c.l.b16 %v516
      %v553 = vunpack.c.l.b16 %v517
      %v554 = vunpack.c.l.b16 %v518
      %v555 = vunpack.c.l.b16 %v519
      %v556 = vunpack.c.l.b16 %v520
      %v557 = vunpack.c.l.b16 %v521
      %v558 = vunpack.c.l.b16 %v522
      %v559 = vunpack.c.l.b16 %v523
      %v560 = vunpack.c.l.b16 %v524
      %v561 = vunpack.c.l.b16 %v525
      %v562 = vunpack.c.l.b16 %v526
      %v563 = vunpack.c.l.b16 %v527
      %v564 = vunpack.c.l.b16 %v528
      %v565 = vpack.c.b16 %v550, %v549
      %v566 = vpack.c.b16 %v552, %v551
      %v567 = vpack.c.b16 %v554, %v553
      %v568 = vpack.c.b16 %v556, %v555
      %v569 = vpack.c.b16 %v558, %v557
      %v570 = vpack.c.b16 %v560, %v559
      %v571 = vpack.c.b16 %v562, %v561
      %v572 = vpack.c.b16 %v564, %v563
      %581 = vmatpush.bf16.msra.mxu0 %v572
      %582 = vmatpush.bf16.msra.mxu0 %v571
      %583 = vmatpush.bf16.msra.mxu0 %v570
      %584 = vmatpush.bf16.msra.mxu0 %v569
      %585 = vmatpush.bf16.msra.mxu0 %v568
      %586 = vmatpush.bf16.msra.mxu0 %v567
      %587 = vmatpush.bf16.msra.mxu0 %v566
      %588 = vmatpush.bf16.msra.mxu0 %v565
      %589 = vmatmul.bf16.gmra.mxu0 %v505
      %v590 = vpop.f32.mrf.mxu0
      %v591 = vadd.f32 %v531, %v590
      %v592 = vpop.f32.mrf.mxu0
      %v593 = vadd.f32 %v531, %v592
      %594 = vmatmul.bf16.gmra.mxu0 %v506
      %v595 = vpop.f32.mrf.mxu0
      %v596 = vadd.f32 %v531, %v595
      %v597 = vpop.f32.mrf.mxu0
      %v598 = vadd.f32 %v531, %v597
      %599 = vmatmul.bf16.gmra.mxu0 %v507
      %v600 = vpop.f32.mrf.mxu0
      %v601 = vadd.f32 %v531, %v600
      %v602 = vpop.f32.mrf.mxu0
      %v603 = vadd.f32 %v531, %v602
      %604 = vmatmul.bf16.gmra.mxu0 %v508
      %v605 = vpop.f32.mrf.mxu0
      %v606 = vadd.f32 %v531, %v605
      %v607 = vpop.f32.mrf.mxu0
      %v608 = vadd.f32 %v531, %v607
      %609 = vmatmul.bf16.gmra.mxu0 %v509
      %v610 = vpop.f32.mrf.mxu0
      %v611 = vadd.f32 %v531, %v610
      %v612 = vpop.f32.mrf.mxu0
      %v613 = vadd.f32 %v531, %v612
      %614 = vmatmul.bf16.gmra.mxu0 %v510
      %v615 = vpop.f32.mrf.mxu0
      %v616 = vadd.f32 %v531, %v615
      %v617 = vpop.f32.mrf.mxu0
      %v618 = vadd.f32 %v531, %v617
      %619 = vmatmul.bf16.gmra.mxu0 %v511
      %v620 = vpop.f32.mrf.mxu0
      %v621 = vadd.f32 %v531, %v620
      %v622 = vpop.f32.mrf.mxu0
      %v623 = vadd.f32 %v531, %v622
      %624 = vmatmul.bf16.gmra.mxu0 %v512
      %v625 = vpop.f32.mrf.mxu0
      %v626 = vadd.f32 %v531, %v625
      %v627 = vpop.f32.mrf.mxu0
      %v628 = vadd.f32 %v531, %v627
      %629 = vdwg.mxu0
      %v630 = vmax.f32 %v591, 0.0
      %v631 = vmax.f32 %v593, 0.0
      %v632 = vmax.f32 %v596, 0.0
      %v633 = vmax.f32 %v598, 0.0
      %v634 = vmax.f32 %v601, 0.0
      %v635 = vmax.f32 %v603, 0.0
      %v636 = vmax.f32 %v606, 0.0
      %v637 = vmax.f32 %v608, 0.0
      %v638 = vmax.f32 %v611, 0.0
      %v639 = vmax.f32 %v613, 0.0
      %v640 = vmax.f32 %v616, 0.0
      %v641 = vmax.f32 %v618, 0.0
      %v642 = vmax.f32 %v621, 0.0
      %v643 = vmax.f32 %v623, 0.0
      %v644 = vmax.f32 %v626, 0.0
      %v645 = vmax.f32 %v628, 0.0
      %v646 = vpack.c.bf16 %v631, %v630
      %v647 = vpack.c.bf16 %v633, %v632
      %v648 = vpack.c.bf16 %v635, %v634
      %v649 = vpack.c.bf16 %v637, %v636
      %v650 = vpack.c.bf16 %v639, %v638
      %v651 = vpack.c.bf16 %v641, %v640
      %v652 = vpack.c.bf16 %v643, %v642
      %v653 = vpack.c.bf16 %v645, %v644
      %v654 = vld [vmem:[%s5] sm:$0xf]
      %v655 = vld [vmem:[%s5 + $0x4] sm:$0xf]
      %v656 = vld [vmem:[%s5 + $0x8] sm:$0xf]
      %v657 = vld [vmem:[%s5 + $0xc] sm:$0xf]
      %v658 = vld [vmem:[%s5 + $0x10] sm:$0xf]
      %v659 = vld [vmem:[%s5 + $0x14] sm:$0xf]
      %v660 = vld [vmem:[%s5 + $0x18] sm:$0xf]
      %v661 = vld [vmem:[%s5 + $0x1c] sm:$0xf]
      %v662 = vld [vmem:[%s6] sm:$0x1]
      %v664 = vperm.slane %v662, 0
      %v674 = vunpack.c.l.b16 %v654
      %v675 = vunpack.c.l.b16 %v655
      %v676 = vunpack.c.l.b16 %v656
      %v677 = vunpack.c.l.b16 %v657
      %v678 = vunpack.c.l.b16 %v658
      %v679 = vunpack.c.l.b16 %v659
      %v680 = vunpack.c.l.b16 %v660
      %v681 = vunpack.c.l.b16 %v661
      %v682 = vpack.c.b16 %v675, %v674
      %v683 = vpack.c.b16 %v677, %v676
      %v684 = vpack.c.b16 %v679, %v678
      %v685 = vpack.c.b16 %v681, %v680
      %vm690 = vcmask 523264
      %v692 = vsel %vm690, %v646, 0
      %v695 = vsel %vm690, %v647, 0
      %v698 = vsel %vm690, %v648, 0
      %v701 = vsel %vm690, %v649, 0
      %v704 = vsel %vm690, %v650, 0
      %v707 = vsel %vm690, %v651, 0
      %v710 = vsel %vm690, %v652, 0
      %v713 = vsel %vm690, %v653, 0
      %715 = vmatpush.bf16.msra.mxu0 0
      %716 = vmatpush.bf16.msra.mxu0 0
      %717 = vmatpush.bf16.msra.mxu0 0
      %718 = vmatpush.bf16.msra.mxu0 0
      %719 = vmatpush.bf16.msra.mxu0 %v685
      %720 = vmatpush.bf16.msra.mxu0 %v684
      %721 = vmatpush.bf16.msra.mxu0 %v683
      %722 = vmatpush.bf16.msra.mxu0 %v682
      %723 = vmatmul.bf16.gmra.mxu0 %v692
      %v724 = vpop.f32.mrf.mxu0
      %v725 = vadd.f32 %v664, %v724
      %v726 = vpop.f32.mrf.mxu0
      %v727 = vadd.f32 %v664, %v726
      %728 = vmatmul.bf16.gmra.mxu0 %v695
      %v729 = vpop.f32.mrf.mxu0
      %v730 = vadd.f32 %v664, %v729
      %v731 = vpop.f32.mrf.mxu0
      %v732 = vadd.f32 %v664, %v731
      %733 = vmatmul.bf16.gmra.mxu0 %v698
      %v734 = vpop.f32.mrf.mxu0
      %v735 = vadd.f32 %v664, %v734
      %v736 = vpop.f32.mrf.mxu0
      %v737 = vadd.f32 %v664, %v736
      %738 = vmatmul.bf16.gmra.mxu0 %v701
      %v739 = vpop.f32.mrf.mxu0
      %v740 = vadd.f32 %v664, %v739
      %v741 = vpop.f32.mrf.mxu0
      %v742 = vadd.f32 %v664, %v741
      %743 = vmatmul.bf16.gmra.mxu0 %v704
      %v744 = vpop.f32.mrf.mxu0
      %v745 = vadd.f32 %v664, %v744
      %v746 = vpop.f32.mrf.mxu0
      %v747 = vadd.f32 %v664, %v746
      %748 = vmatmul.bf16.gmra.mxu0 %v707
      %v749 = vpop.f32.mrf.mxu0
      %v750 = vadd.f32 %v664, %v749
      %v751 = vpop.f32.mrf.mxu0
      %v752 = vadd.f32 %v664, %v751
      %753 = vmatmul.bf16.gmra.mxu0 %v710
      %v754 = vpop.f32.mrf.mxu0
      %v755 = vadd.f32 %v664, %v754
      %v756 = vpop.f32.mrf.mxu0
      %v757 = vadd.f32 %v664, %v756
      %758 = vmatmul.bf16.gmra.mxu0 %v713
      %v759 = vpop.f32.mrf.mxu0
      %v760 = vadd.f32 %v664, %v759
      %v761 = vpop.f32.mrf.mxu0
      %v762 = vadd.f32 %v664, %v761
      %763 = vdwg.mxu0
      %v764 = vmax.f32 %v725, 0.0
      %v765 = vmax.f32 %v727, 0.0
      %v766 = vmax.f32 %v730, 0.0
      %v767 = vmax.f32 %v732, 0.0
      %v768 = vmax.f32 %v735, 0.0
      %v769 = vmax.f32 %v737, 0.0
      %v770 = vmax.f32 %v740, 0.0
      %v771 = vmax.f32 %v742, 0.0
      %v772 = vmax.f32 %v745, 0.0
      %v773 = vmax.f32 %v747, 0.0
      %v774 = vmax.f32 %v750, 0.0
      %v775 = vmax.f32 %v752, 0.0
      %v776 = vmax.f32 %v755, 0.0
      %v777 = vmax.f32 %v757, 0.0
      %v778 = vmax.f32 %v760, 0.0
      %v779 = vmax.f32 %v762, 0.0
      %v780 = vld [vmem:[%s7] sm:$0x1]
      %v781 = vunpack.c.l.bf16 %v780
      %v782 = vperm.slane %v781, 0
      %v783 = vmul.f32 %v764, %v782
      %v784 = vmul.f32 %v765, %v782
      %v785 = vmul.f32 %v766, %v782
      %v786 = vmul.f32 %v767, %v782
      %v787 = vmul.f32 %v768, %v782
      %v788 = vmul.f32 %v769, %v782
      %v789 = vmul.f32 %v770, %v782
      %v790 = vmul.f32 %v771, %v782
      %v791 = vmul.f32 %v772, %v782
      %v792 = vmul.f32 %v773, %v782
      %v793 = vmul.f32 %v774, %v782
      %v794 = vmul.f32 %v775, %v782
      %v795 = vmul.f32 %v776, %v782
      %v796 = vmul.f32 %v777, %v782
      %v797 = vmul.f32 %v778, %v782
      %v798 = vmul.f32 %v779, %v782
      %v799 = vsel %vm415, %v783, 0.0
      %800 = vadd.xlane.f32.xlu0 %v799
      %v801 = vpop.xlane.xlu0 %800
      %v802 = vsel %vm415, %v784, 0.0
      %803 = vadd.xlane.f32.xlu0 %v802
      %v804 = vpop.xlane.xlu0 %803
      %v805 = vsel %vm415, %v785, 0.0
      %806 = vadd.xlane.f32.xlu0 %v805
      %v807 = vpop.xlane.xlu0 %806
      %v808 = vsel %vm415, %v786, 0.0
      %809 = vadd.xlane.f32.xlu0 %v808
      %v810 = vpop.xlane.xlu0 %809
      %v811 = vsel %vm415, %v787, 0.0
      %812 = vadd.xlane.f32.xlu0 %v811
      %v813 = vpop.xlane.xlu0 %812
      %v814 = vsel %vm415, %v788, 0.0
      %815 = vadd.xlane.f32.xlu0 %v814
      %v816 = vpop.xlane.xlu0 %815
      %v817 = vsel %vm415, %v789, 0.0
      %818 = vadd.xlane.f32.xlu0 %v817
      %v819 = vpop.xlane.xlu0 %818
      %v820 = vsel %vm415, %v790, 0.0
      %821 = vadd.xlane.f32.xlu0 %v820
      %v822 = vpop.xlane.xlu0 %821
      %v823 = vsel %vm415, %v791, 0.0
      %824 = vadd.xlane.f32.xlu0 %v823
      %v825 = vpop.xlane.xlu0 %824
      %v826 = vsel %vm415, %v792, 0.0
      %827 = vadd.xlane.f32.xlu0 %v826
      %v828 = vpop.xlane.xlu0 %827
      %v829 = vsel %vm415, %v793, 0.0
      %830 = vadd.xlane.f32.xlu0 %v829
      %v831 = vpop.xlane.xlu0 %830
      %v832 = vsel %vm415, %v794, 0.0
      %833 = vadd.xlane.f32.xlu0 %v832
      %v834 = vpop.xlane.xlu0 %833
      %v835 = vsel %vm415, %v795, 0.0
      %836 = vadd.xlane.f32.xlu0 %v835
      %v837 = vpop.xlane.xlu0 %836
      %v838 = vsel %vm415, %v796, 0.0
      %839 = vadd.xlane.f32.xlu0 %v838
      %v840 = vpop.xlane.xlu0 %839
      %v841 = vsel %vm415, %v797, 0.0
      %842 = vadd.xlane.f32.xlu0 %v841
      %v843 = vpop.xlane.xlu0 %842
      %v844 = vsel %vm415, %v798, 0.0
      %845 = vadd.xlane.f32.xlu0 %v844
      %v846 = vpop.xlane.xlu0 %845
      %v847 = vld [vmem:[#allocation2] sm:$0x1]
      %v849 = vperm.slane %v847, 0
      %v851 = vadd.f32 %v801, %v849
      %v852 = vadd.f32 %v804, %v849
      %v853 = vadd.f32 %v807, %v849
      %v854 = vadd.f32 %v810, %v849
      %v855 = vadd.f32 %v813, %v849
      %v856 = vadd.f32 %v816, %v849
      %v857 = vadd.f32 %v819, %v849
      %v858 = vadd.f32 %v822, %v849
      %v859 = vadd.f32 %v825, %v849
      %v860 = vadd.f32 %v828, %v849
      %v861 = vadd.f32 %v831, %v849
      %v862 = vadd.f32 %v834, %v849
      %v863 = vadd.f32 %v837, %v849
      %v864 = vadd.f32 %v840, %v849
      %v865 = vadd.f32 %v843, %v849
      %v866 = vadd.f32 %v846, %v849
      %v867 = vxor.u32 %v851, 2147483648
      %v868 = vxor.u32 %v852, 2147483648
      %v869 = vxor.u32 %v853, 2147483648
      %v870 = vxor.u32 %v854, 2147483648
      %v871 = vxor.u32 %v855, 2147483648
      %v872 = vxor.u32 %v856, 2147483648
      %v873 = vxor.u32 %v857, 2147483648
      %v874 = vxor.u32 %v858, 2147483648
      %v875 = vxor.u32 %v859, 2147483648
      %v876 = vxor.u32 %v860, 2147483648
      %v877 = vxor.u32 %v861, 2147483648
      %v878 = vxor.u32 %v862, 2147483648
      %v879 = vxor.u32 %v863, 2147483648
      %v880 = vxor.u32 %v864, 2147483648
      %v881 = vxor.u32 %v865, 2147483648
      %v882 = vxor.u32 %v866, 2147483648
      %v883 = vmul.f32 %v867, 1.442695
      %v884 = vpow.pop %v883
      %v885 = vmul.f32 %v868, 1.442695
      %v886 = vpow.pop %v885
      %v887 = vmul.f32 %v869, 1.442695
      %v888 = vpow.pop %v887
      %v889 = vmul.f32 %v870, 1.442695
      %v890 = vpow.pop %v889
      %v891 = vmul.f32 %v871, 1.442695
      %v892 = vpow.pop %v891
      %v893 = vmul.f32 %v872, 1.442695
      %v894 = vpow.pop %v893
      %v895 = vmul.f32 %v873, 1.442695
      %v896 = vpow.pop %v895
      %v897 = vmul.f32 %v874, 1.442695
      %v898 = vpow.pop %v897
      %v899 = vmul.f32 %v875, 1.442695
      %v900 = vpow.pop %v899
      %v901 = vmul.f32 %v876, 1.442695
      %v902 = vpow.pop %v901
      %v903 = vmul.f32 %v877, 1.442695
      %v904 = vpow.pop %v903
      %v905 = vmul.f32 %v878, 1.442695
      %v906 = vpow.pop %v905
      %v907 = vmul.f32 %v879, 1.442695
      %v908 = vpow.pop %v907
      %v909 = vmul.f32 %v880, 1.442695
      %v910 = vpow.pop %v909
      %v911 = vmul.f32 %v881, 1.442695
      %v912 = vpow.pop %v911
      %v913 = vmul.f32 %v882, 1.442695
      %v914 = vpow.pop %v913
      %v915 = vadd.f32 %v884, 1.0
      %v916 = vadd.f32 %v886, 1.0
      %v917 = vadd.f32 %v888, 1.0
      %v918 = vadd.f32 %v890, 1.0
      %v919 = vadd.f32 %v892, 1.0
      %v920 = vadd.f32 %v894, 1.0
      %v921 = vadd.f32 %v896, 1.0
      %v922 = vadd.f32 %v898, 1.0
      %v923 = vadd.f32 %v900, 1.0
      %v924 = vadd.f32 %v902, 1.0
      %v925 = vadd.f32 %v904, 1.0
      %v926 = vadd.f32 %v906, 1.0
      %v927 = vadd.f32 %v908, 1.0
      %v928 = vadd.f32 %v910, 1.0
      %v929 = vadd.f32 %v912, 1.0
      %v930 = vadd.f32 %v914, 1.0
      %v931 = vrcp.pop %v915
      %v932 = vmul.f32 %v915, %v931
      %v933 = vsub.f32 1.0, %v932
      %v934 = vmul.f32 %v931, %v933
      %v935 = vadd.f32 %v931, %v934
      %vm936 = vweird.f32 %v915
      %vm937 = vweird.f32 %v931
      %vm938 = vmor %vm936, %vm937
      %v939 = vsel %vm938, %v931, %v935
      %v940 = vand.u32 2147483647, %v915
      %vm941 = vcmp.eq.f32.partialorder %v940, 8.507059e+37
      %v942 = vand.u32 %v915, 2147483648
      %v943 = vor.u32 1.1754944e-38, %v942
      %v944 = vsel %vm941, %v943, %v939
      %v945 = vmul.f32 1.0, %v944
      %v946 = vrcp.pop %v916
      %v947 = vmul.f32 %v916, %v946
      %v948 = vsub.f32 1.0, %v947
      %v949 = vmul.f32 %v946, %v948
      %v950 = vadd.f32 %v946, %v949
      %vm951 = vweird.f32 %v916
      %vm952 = vweird.f32 %v946
      %vm953 = vmor %vm951, %vm952
      %v954 = vsel %vm953, %v946, %v950
      %v955 = vand.u32 2147483647, %v916
      %vm956 = vcmp.eq.f32.partialorder %v955, 8.507059e+37
      %v957 = vand.u32 %v916, 2147483648
      %v958 = vor.u32 1.1754944e-38, %v957
      %v959 = vsel %vm956, %v958, %v954
      %v960 = vmul.f32 1.0, %v959
      %v961 = vrcp.pop %v917
      %v962 = vmul.f32 %v917, %v961
      %v963 = vsub.f32 1.0, %v962
      %v964 = vmul.f32 %v961, %v963
      %v965 = vadd.f32 %v961, %v964
      %vm966 = vweird.f32 %v917
      %vm967 = vweird.f32 %v961
      %vm968 = vmor %vm966, %vm967
      %v969 = vsel %vm968, %v961, %v965
      %v970 = vand.u32 2147483647, %v917
      %vm971 = vcmp.eq.f32.partialorder %v970, 8.507059e+37
      %v972 = vand.u32 %v917, 2147483648
      %v973 = vor.u32 1.1754944e-38, %v972
      %v974 = vsel %vm971, %v973, %v969
      %v975 = vmul.f32 1.0, %v974
      %v976 = vrcp.pop %v918
      %v977 = vmul.f32 %v918, %v976
      %v978 = vsub.f32 1.0, %v977
      %v979 = vmul.f32 %v976, %v978
      %v980 = vadd.f32 %v976, %v979
      %vm981 = vweird.f32 %v918
      %vm982 = vweird.f32 %v976
      %vm983 = vmor %vm981, %vm982
      %v984 = vsel %vm983, %v976, %v980
      %v985 = vand.u32 2147483647, %v918
      %vm986 = vcmp.eq.f32.partialorder %v985, 8.507059e+37
      %v987 = vand.u32 %v918, 2147483648
      %v988 = vor.u32 1.1754944e-38, %v987
      %v989 = vsel %vm986, %v988, %v984
      %v990 = vmul.f32 1.0, %v989
      %v991 = vrcp.pop %v919
      %v992 = vmul.f32 %v919, %v991
      %v993 = vsub.f32 1.0, %v992
      %v994 = vmul.f32 %v991, %v993
      %v995 = vadd.f32 %v991, %v994
      %vm996 = vweird.f32 %v919
      %vm997 = vweird.f32 %v991
      %vm998 = vmor %vm996, %vm997
      %v999 = vsel %vm998, %v991, %v995
      %v1000 = vand.u32 2147483647, %v919
      %vm1001 = vcmp.eq.f32.partialorder %v1000, 8.507059e+37
      %v1002 = vand.u32 %v919, 2147483648
      %v1003 = vor.u32 1.1754944e-38, %v1002
      %v1004 = vsel %vm1001, %v1003, %v999
      %v1005 = vmul.f32 1.0, %v1004
      %v1006 = vrcp.pop %v920
      %v1007 = vmul.f32 %v920, %v1006
      %v1008 = vsub.f32 1.0, %v1007
      %v1009 = vmul.f32 %v1006, %v1008
      %v1010 = vadd.f32 %v1006, %v1009
      %vm1011 = vweird.f32 %v920
      %vm1012 = vweird.f32 %v1006
      %vm1013 = vmor %vm1011, %vm1012
      %v1014 = vsel %vm1013, %v1006, %v1010
      %v1015 = vand.u32 2147483647, %v920
      %vm1016 = vcmp.eq.f32.partialorder %v1015, 8.507059e+37
      %v1017 = vand.u32 %v920, 2147483648
      %v1018 = vor.u32 1.1754944e-38, %v1017
      %v1019 = vsel %vm1016, %v1018, %v1014
      %v1020 = vmul.f32 1.0, %v1019
      %v1021 = vrcp.pop %v921
      %v1022 = vmul.f32 %v921, %v1021
      %v1023 = vsub.f32 1.0, %v1022
      %v1024 = vmul.f32 %v1021, %v1023
      %v1025 = vadd.f32 %v1021, %v1024
      %vm1026 = vweird.f32 %v921
      %vm1027 = vweird.f32 %v1021
      %vm1028 = vmor %vm1026, %vm1027
      %v1029 = vsel %vm1028, %v1021, %v1025
      %v1030 = vand.u32 2147483647, %v921
      %vm1031 = vcmp.eq.f32.partialorder %v1030, 8.507059e+37
      %v1032 = vand.u32 %v921, 2147483648
      %v1033 = vor.u32 1.1754944e-38, %v1032
      %v1034 = vsel %vm1031, %v1033, %v1029
      %v1035 = vmul.f32 1.0, %v1034
      %v1036 = vrcp.pop %v922
      %v1037 = vmul.f32 %v922, %v1036
      %v1038 = vsub.f32 1.0, %v1037
      %v1039 = vmul.f32 %v1036, %v1038
      %v1040 = vadd.f32 %v1036, %v1039
      %vm1041 = vweird.f32 %v922
      %vm1042 = vweird.f32 %v1036
      %vm1043 = vmor %vm1041, %vm1042
      %v1044 = vsel %vm1043, %v1036, %v1040
      %v1045 = vand.u32 2147483647, %v922
      %vm1046 = vcmp.eq.f32.partialorder %v1045, 8.507059e+37
      %v1047 = vand.u32 %v922, 2147483648
      %v1048 = vor.u32 1.1754944e-38, %v1047
      %v1049 = vsel %vm1046, %v1048, %v1044
      %v1050 = vmul.f32 1.0, %v1049
      %v1051 = vrcp.pop %v923
      %v1052 = vmul.f32 %v923, %v1051
      %v1053 = vsub.f32 1.0, %v1052
      %v1054 = vmul.f32 %v1051, %v1053
      %v1055 = vadd.f32 %v1051, %v1054
      %vm1056 = vweird.f32 %v923
      %vm1057 = vweird.f32 %v1051
      %vm1058 = vmor %vm1056, %vm1057
      %v1059 = vsel %vm1058, %v1051, %v1055
      %v1060 = vand.u32 2147483647, %v923
      %vm1061 = vcmp.eq.f32.partialorder %v1060, 8.507059e+37
      %v1062 = vand.u32 %v923, 2147483648
      %v1063 = vor.u32 1.1754944e-38, %v1062
      %v1064 = vsel %vm1061, %v1063, %v1059
      %v1065 = vmul.f32 1.0, %v1064
      %v1066 = vrcp.pop %v924
      %v1067 = vmul.f32 %v924, %v1066
      %v1068 = vsub.f32 1.0, %v1067
      %v1069 = vmul.f32 %v1066, %v1068
      %v1070 = vadd.f32 %v1066, %v1069
      %vm1071 = vweird.f32 %v924
      %vm1072 = vweird.f32 %v1066
      %vm1073 = vmor %vm1071, %vm1072
      %v1074 = vsel %vm1073, %v1066, %v1070
      %v1075 = vand.u32 2147483647, %v924
      %vm1076 = vcmp.eq.f32.partialorder %v1075, 8.507059e+37
      %v1077 = vand.u32 %v924, 2147483648
      %v1078 = vor.u32 1.1754944e-38, %v1077
      %v1079 = vsel %vm1076, %v1078, %v1074
      %v1080 = vmul.f32 1.0, %v1079
      %v1081 = vrcp.pop %v925
      %v1082 = vmul.f32 %v925, %v1081
      %v1083 = vsub.f32 1.0, %v1082
      %v1084 = vmul.f32 %v1081, %v1083
      %v1085 = vadd.f32 %v1081, %v1084
      %vm1086 = vweird.f32 %v925
      %vm1087 = vweird.f32 %v1081
      %vm1088 = vmor %vm1086, %vm1087
      %v1089 = vsel %vm1088, %v1081, %v1085
      %v1090 = vand.u32 2147483647, %v925
      %vm1091 = vcmp.eq.f32.partialorder %v1090, 8.507059e+37
      %v1092 = vand.u32 %v925, 2147483648
      %v1093 = vor.u32 1.1754944e-38, %v1092
      %v1094 = vsel %vm1091, %v1093, %v1089
      %v1095 = vmul.f32 1.0, %v1094
      %v1096 = vrcp.pop %v926
      %v1097 = vmul.f32 %v926, %v1096
      %v1098 = vsub.f32 1.0, %v1097
      %v1099 = vmul.f32 %v1096, %v1098
      %v1100 = vadd.f32 %v1096, %v1099
      %vm1101 = vweird.f32 %v926
      %vm1102 = vweird.f32 %v1096
      %vm1103 = vmor %vm1101, %vm1102
      %v1104 = vsel %vm1103, %v1096, %v1100
      %v1105 = vand.u32 2147483647, %v926
      %vm1106 = vcmp.eq.f32.partialorder %v1105, 8.507059e+37
      %v1107 = vand.u32 %v926, 2147483648
      %v1108 = vor.u32 1.1754944e-38, %v1107
      %v1109 = vsel %vm1106, %v1108, %v1104
      %v1110 = vmul.f32 1.0, %v1109
      %v1111 = vrcp.pop %v927
      %v1112 = vmul.f32 %v927, %v1111
      %v1113 = vsub.f32 1.0, %v1112
      %v1114 = vmul.f32 %v1111, %v1113
      %v1115 = vadd.f32 %v1111, %v1114
      %vm1116 = vweird.f32 %v927
      %vm1117 = vweird.f32 %v1111
      %vm1118 = vmor %vm1116, %vm1117
      %v1119 = vsel %vm1118, %v1111, %v1115
      %v1120 = vand.u32 2147483647, %v927
      %vm1121 = vcmp.eq.f32.partialorder %v1120, 8.507059e+37
      %v1122 = vand.u32 %v927, 2147483648
      %v1123 = vor.u32 1.1754944e-38, %v1122
      %v1124 = vsel %vm1121, %v1123, %v1119
      %v1125 = vmul.f32 1.0, %v1124
      %v1126 = vrcp.pop %v928
      %v1127 = vmul.f32 %v928, %v1126
      %v1128 = vsub.f32 1.0, %v1127
      %v1129 = vmul.f32 %v1126, %v1128
      %v1130 = vadd.f32 %v1126, %v1129
      %vm1131 = vweird.f32 %v928
      %vm1132 = vweird.f32 %v1126
      %vm1133 = vmor %vm1131, %vm1132
      %v1134 = vsel %vm1133, %v1126, %v1130
      %v1135 = vand.u32 2147483647, %v928
      %vm1136 = vcmp.eq.f32.partialorder %v1135, 8.507059e+37
      %v1137 = vand.u32 %v928, 2147483648
      %v1138 = vor.u32 1.1754944e-38, %v1137
      %v1139 = vsel %vm1136, %v1138, %v1134
      %v1140 = vmul.f32 1.0, %v1139
      %v1141 = vrcp.pop %v929
      %v1142 = vmul.f32 %v929, %v1141
      %v1143 = vsub.f32 1.0, %v1142
      %v1144 = vmul.f32 %v1141, %v1143
      %v1145 = vadd.f32 %v1141, %v1144
      %vm1146 = vweird.f32 %v929
      %vm1147 = vweird.f32 %v1141
      %vm1148 = vmor %vm1146, %vm1147
      %v1149 = vsel %vm1148, %v1141, %v1145
      %v1150 = vand.u32 2147483647, %v929
      %vm1151 = vcmp.eq.f32.partialorder %v1150, 8.507059e+37
      %v1152 = vand.u32 %v929, 2147483648
      %v1153 = vor.u32 1.1754944e-38, %v1152
      %v1154 = vsel %vm1151, %v1153, %v1149
      %v1155 = vmul.f32 1.0, %v1154
      %v1156 = vrcp.pop %v930
      %v1157 = vmul.f32 %v930, %v1156
      %v1158 = vsub.f32 1.0, %v1157
      %v1159 = vmul.f32 %v1156, %v1158
      %v1160 = vadd.f32 %v1156, %v1159
      %vm1161 = vweird.f32 %v930
      %vm1162 = vweird.f32 %v1156
      %vm1163 = vmor %vm1161, %vm1162
      %v1164 = vsel %vm1163, %v1156, %v1160
      %v1165 = vand.u32 2147483647, %v930
      %vm1166 = vcmp.eq.f32.partialorder %v1165, 8.507059e+37
      %v1167 = vand.u32 %v930, 2147483648
      %v1168 = vor.u32 1.1754944e-38, %v1167
      %v1169 = vsel %vm1166, %v1168, %v1164
      %v1170 = vmul.f32 1.0, %v1169
      %vm1171 = vcmask 7168
      %1172 = vst.msk [vmem:[%s336] sm:$0xff] %vm1171, %v945
      %1173 = vst.msk [vmem:[%s336 + $0x8] sm:$0xff] %vm1171, %v960
      %1174 = vst.msk [vmem:[%s336 + $0x10] sm:$0xff] %vm1171, %v975
      %1175 = vst.msk [vmem:[%s336 + $0x18] sm:$0xff] %vm1171, %v990
      %1176 = vst.msk [vmem:[%s336 + $0x20] sm:$0xff] %vm1171, %v1005
      %1177 = vst.msk [vmem:[%s336 + $0x28] sm:$0xff] %vm1171, %v1020
      %1178 = vst.msk [vmem:[%s336 + $0x30] sm:$0xff] %vm1171, %v1035
      %1179 = vst.msk [vmem:[%s336 + $0x38] sm:$0xff] %vm1171, %v1050
      %1180 = vst.msk [vmem:[%s336 + $0x40] sm:$0xff] %vm1171, %v1065
      %1181 = vst.msk [vmem:[%s336 + $0x48] sm:$0xff] %vm1171, %v1080
      %1182 = vst.msk [vmem:[%s336 + $0x50] sm:$0xff] %vm1171, %v1095
      %1183 = vst.msk [vmem:[%s336 + $0x58] sm:$0xff] %vm1171, %v1110
      %1184 = vst.msk [vmem:[%s336 + $0x60] sm:$0xff] %vm1171, %v1125
      %1185 = vst.msk [vmem:[%s336 + $0x68] sm:$0xff] %vm1171, %v1140
      %1186 = vst.msk [vmem:[%s336 + $0x70] sm:$0xff] %vm1171, %v1155
      %1187 = vst.msk [vmem:[%s336 + $0x78] sm:$0xff] %vm1171, %v1170
      %s1188 = smul.u32 16, %s22
      %p1189 = scmp.lt.s32.totalorder %s1188, 31
      %s1190 = scalar_select %p1189, %s1188, 31
      %s1191 = smul.addr %s1190, 8
      %s1192 = scalar_lea.vmem %s9, %s1191
      // Predicated region
      $region57: #{tpu_custom_call.1} parent=55 // pred_check
        %p1193 = pneg %p234
      $region58: #{tpu_custom_call.1} parent=55 // pred_check_branch
        %1195 = sbr.rel (%p1193) target = $region60
      $region59: #{tpu_custom_call.1} parent=55 // pred_region
        %s1196 = smul.u32 16, %s22
      $region60: #{tpu_custom_call.1} parent=55 // pred_fallthru
        _
    $region56: #{tpu_custom_call.1} parent=5 // pred_fallthru
      _
    %p1197 = scmp.le.s32.totalorder 2, %s17
    // Predicated region
    $region61: #{tpu_custom_call.1} parent=5 // pred_check
      %p1198 = pneg %p1197
    $region62: #{tpu_custom_call.1} parent=5 // pred_check_branch
      %1200 = sbr.rel (%p1198) target = $region64
    $region63: #{tpu_custom_call.1} parent=5 // pred_region
      %s1201 = ssub.s32 %s17, 2
      // Predicated region
      $region65: #{tpu_custom_call.1} parent=63 // pred_check
        %p1202 = pneg %p240
      $region66: #{tpu_custom_call.1} parent=63 // pred_check_branch
        %1204 = sbr.rel (%p1202) target = $region68
      $region67: #{tpu_custom_call.1} parent=63 // pred_region
        %s1205 = smul.u32 16, %s23
        %p1206 = scmp.lt.s32.totalorder %s1205, 31
        %s1207 = scalar_select %p1206, %s1205, 31
        %s1208 = smul.addr %s1207, 8
        %s1209 = scalar_lea.vmem %s9, %s1208
      $region68: #{tpu_custom_call.1} parent=63 // pred_fallthru
        _
    $region64: #{tpu_custom_call.1} parent=5 // pred_fallthru
      _
  $region6: #{tpu_custom_call.1} parent=0 // loop_footer
    %s21 = sadd.s32 1, %s17
  $region7: #{tpu_custom_call.1} parent=0 // loop_footer_branch
    %16 = sbr.rel target = $region3
  $region8: #{tpu_custom_call.1} parent=0 // loop_exit
    _

</llo_original>
